<compile_context>
chip_gen: v7x
topology: tpu7x:2x2x1
jax: 0.10.0
libtpu: 0.0.40
codegen_flags: <defaults>
</compile_context>

<pallas_src>
import jax
import jax.numpy as jnp
import numpy as np
from jax.experimental import pallas as pl
from jax.experimental.pallas import tpu as pltpu

_SMOOTH_L1_BETA = 1.0  # nn.SmoothL1Loss() default; module's self.beta=0.5 is unused.


def _smooth_l1(x):
    ax = jnp.abs(x)
    return jnp.where(ax < _SMOOTH_L1_BETA,
                     (0.5 / _SMOOTH_L1_BETA) * x * x,
                     ax - 0.5 * _SMOOTH_L1_BETA)


def _round_up(x, m):
    return ((x + m - 1) // m) * m


def _vmem_capacity_bytes():
    """Physical VMEM per TensorCore; conservative fallback if query fails."""
    try:
        cap = getattr(pltpu.get_tpu_info(), "vmem_capacity_bytes", None)
        if cap:
            return int(cap)
    except Exception:
        pass
    return 64 * 1024 * 1024  # v7x per-TC size — safe lower bound everywhere.


def _pick_block_b(B, T, D, in_itemsize, total_budget_bytes):
    """Rows per grid step under a realistic footprint model:
    2 inputs x 2 pipeline buffers (input dtype) + ~4 tile-sized f32 temps."""
    Tp = _round_up(T, 8)
    Dp = _round_up(D, 128)
    bytes_per_row = Tp * Dp * (2 * 2 * in_itemsize + 4 * 4)
    bb = max(1, total_budget_bytes // bytes_per_row)
    if bb >= B:
        bb = B
        if B >= 16:
            # v7x megacore: keep >= 2 grid tiles so the "parallel" axis can be
            # sharded across both TensorCores (~0.35 us/step cost elsewhere).
            bb = _round_up(pl.cdiv(B, 2), 8)
    else:
        bb = min(B, max(8, (bb // 8) * 8))
    return int(bb)


def _loss_kernel(p_ref, t_ref, len_ref, word_ref, sent_ref):
    _, T, _ = p_ref.shape
    p = p_ref[...]                                          # (BB, T, D)
    t = t_ref[...]
    L = len_ref[...]                                        # (BB, 1, 1) int32

    diff = p.astype(jnp.float32) - t.astype(jnp.float32)    # (BB, T, D) f32

    # Hoisted time-index iota; broadcast-compare against per-row lengths.
    tpos = jax.lax.broadcasted_iota(jnp.int32, (1, T, 1), 1)
    mask = tpos < L                                         # (BB, T, 1) bool

    # Single masked diff, via where (NaN/Inf-safe for padded / ragged rows).
    md = jnp.where(mask, diff, 0.0)                         # (BB, T, D)

    # --- word-loss partial: sum of SmoothL1 over masked diff ----------------
    w = jnp.sum(_smooth_l1(md), axis=1, keepdims=True)      # (BB, 1, D)
    word_ref[...] = jnp.sum(w, axis=0, keepdims=True)       # (1, 1, D)

    # --- sentence-loss partial: per-row mean over valid timesteps -----------
    t_sum = jnp.sum(md, axis=1, keepdims=True)              # (BB, 1, D)
    Lf = jnp.maximum(L.astype(jnp.float32), 1.0)            # guard len==0 rows
    s = _smooth_l1(t_sum / Lf)                              # (BB, 1, D)
    sent_ref[...] = jnp.sum(s, axis=0, keepdims=True)       # (1, 1, D)


def smooth_l1_word_and_sentence_loss(preds, targets, decode_lengths, *, block_b=None):
    """Pallas TPU kernel computing word_loss + sentence_loss / B. Returns f32 scalar."""
    B, T, D = preds.shape

    cap = _vmem_capacity_bytes()
    total_budget = min(int(cap * 0.5), 56 * 1024 * 1024)      # inputs x2 + temps
    vmem_limit = min(int(cap * 3 // 4), 96 * 1024 * 1024)

    if block_b is None:
        block_b = _pick_block_b(B, T, D, preds.dtype.itemsize, total_budget)
    num_tiles = int(pl.cdiv(B, block_b))
    B_ceil = num_tiles * block_b

    # Only the tiny length vector is padded (zeros => fully masked rows); the
    # big preds/targets tensors are NOT copied.  The ragged last tile reads
    # undefined data there, which the zero lengths mask out.
    lens3 = decode_lengths.astype(jnp.int32).reshape(B, 1, 1)
    if B_ceil != B:
        lens3 = jnp.pad(lens3, ((0, B_ceil - B), (0, 0), (0, 0)))

    word_part, sent_part = pl.pallas_call(
        _loss_kernel,
        out_shape=(jax.ShapeDtypeStruct((num_tiles, 1, D), jnp.float32),
                   jax.ShapeDtypeStruct((num_tiles, 1, D), jnp.float32)),
        grid=(num_tiles,),
        in_specs=[
            pl.BlockSpec((block_b, T, D), lambda i: (i, 0, 0)),
            pl.BlockSpec((block_b, T, D), lambda i: (i, 0, 0)),
            pl.BlockSpec((block_b, 1, 1), lambda i: (i, 0, 0)),
        ],
        out_specs=(pl.BlockSpec((1, 1, D), lambda i: (i, 0, 0)),
                   pl.BlockSpec((1, 1, D), lambda i: (i, 0, 0))),
        compiler_params=pltpu.CompilerParams(
            dimension_semantics=("parallel",),       # carry-free grid
            vmem_limit_bytes=int(vmem_limit)),
    )(preds, targets, lens3)

    # Tiny final reductions + normalizers (cheaper in XLA than in-kernel).
    word_sum = jnp.sum(word_part)
    sent_sum = jnp.sum(sent_part)
    n_words = jnp.maximum(jnp.sum(decode_lengths).astype(jnp.float32) * D, 1.0)
    return word_sum / n_words + sent_sum / jnp.float32(D * B)


def _reference_loss(preds, targets, lens):
    """Pure numpy (float64) reference mirroring the PyTorch forward."""
    preds = np.asarray(preds, dtype=np.float64)
    targets = np.asarray(targets, dtype=np.float64)
    lens = np.asarray(lens)
    B, T, D = preds.shape

    def sl1(x):
        ax = np.abs(x)
        return np.where(ax < _SMOOTH_L1_BETA, 0.5 * x * x / _SMOOTH_L1_BETA,
                        ax - 0.5 * _SMOOTH_L1_BETA)

    word_num, word_den, sent = 0.0, 0, 0.0
    for b in range(B):
        L = int(lens[b])
        p, t = preds[b, :L], targets[b, :L]
        word_num += sl1(p - t).sum()
        word_den += L * D
        sent += sl1(p.mean(axis=0) - t.mean(axis=0)).mean()
    return word_num / word_den + sent / B


if __name__ == "__main__":
    key = jax.random.PRNGKey(0)

    # Case 1: small shapes, single tile (block_b auto -> B).
    B, T, D = 4, 8, 32
    k1, k2, k3, k4, k5 = jax.random.split(key, 5)
    preds = jax.random.normal(k1, (B, T, D), dtype=jnp.float32)
    targets = jax.random.normal(k2, (B, T, D), dtype=jnp.float32)
    decode_lengths = jnp.array([8, 6, 5, 3], dtype=jnp.int32)  # sorted descending

    loss = smooth_l1_word_and_sentence_loss(preds, targets, decode_lengths)
    loss = jax.block_until_ready(loss)
    ref = _reference_loss(preds, targets, decode_lengths)
    np.testing.assert_allclose(float(loss), float(ref), rtol=1e-4, atol=1e-5)

    # Case 2: multi-tile path with a ragged final tile (B=20, block_b=8 -> 3 tiles),
    # exercising the no-pad / zero-length masking of out-of-range rows.
    B2 = 20
    preds2 = jax.random.normal(k3, (B2, T, D), dtype=jnp.float32)
    targets2 = jax.random.normal(k4, (B2, T, D), dtype=jnp.float32)
    lens2 = jnp.sort(jax.random.randint(k5, (B2,), minval=1, maxval=T + 1))[::-1]
    lens2 = lens2.astype(jnp.int32)

    loss2 = smooth_l1_word_and_sentence_loss(preds2, targets2, lens2, block_b=8)
    loss2 = jax.block_until_ready(loss2)
    ref2 = _reference_loss(preds2, targets2, lens2)
    np.testing.assert_allclose(float(loss2), float(ref2), rtol=1e-4, atol=1e-5)

    print("KERNEL_OK")
</pallas_src>

<mosaic_0001>
module attributes {stable_mosaic.version = 11 : i64} {
  func.func @_loss_kernel(%arg0: i32, %arg1: memref<4x8x32xf32, #tpu.memory_space<vmem>>, %arg2: memref<4x8x32xf32, #tpu.memory_space<vmem>>, %arg3: memref<4x1x1xi32, #tpu.memory_space<vmem>>, %arg4: memref<1x1x32xf32, #tpu.memory_space<vmem>>, %arg5: memref<1x1x32xf32, #tpu.memory_space<vmem>>) attributes {dimension_semantics = [#tpu.dimension_semantics<parallel>], iteration_bounds = array<i64: 1>, scalar_prefetch = 0 : i64, scratch_operands = 0 : i64, tpu.core_type = #tpu.core_type<tc>, window_params = [{transform_indices = @transform_0, window_bounds = array<i64: 4, 8, 32>}, {transform_indices = @transform_1, window_bounds = array<i64: 4, 8, 32>}, {transform_indices = @transform_2, window_bounds = array<i64: 4, 1, 1>}, {transform_indices = @transform_3, window_bounds = array<i64: 1, 1, 32>}, {transform_indices = @transform_4, window_bounds = array<i64: 1, 1, 32>}]} {
    %c0 = arith.constant 0 : index
    %c0_0 = arith.constant 0 : index
    %c0_1 = arith.constant 0 : index
    %0 = vector.load %arg1[%c0, %c0_0, %c0_1] : memref<4x8x32xf32, #tpu.memory_space<vmem>>, vector<4x8x32xf32>
    %c0_2 = arith.constant 0 : index
    %c0_3 = arith.constant 0 : index
    %c0_4 = arith.constant 0 : index
    %1 = vector.load %arg2[%c0_2, %c0_3, %c0_4] : memref<4x8x32xf32, #tpu.memory_space<vmem>>, vector<4x8x32xf32>
    %c0_5 = arith.constant 0 : index
    %c0_6 = arith.constant 0 : index
    %c0_7 = arith.constant 0 : index
    %2 = vector.load %arg3[%c0_5, %c0_6, %c0_7] : memref<4x1x1xi32, #tpu.memory_space<vmem>>, vector<4x1x1xi32>
    %3 = arith.subf %0, %1 : vector<4x8x32xf32>
    %4 = tpu.iota {dimensions = array<i32: 1>} : vector<1x8x1xi32>
    %5 = vector.broadcast %4 : vector<1x8x1xi32> to vector<4x8x1xi32>
    %6 = vector.broadcast %2 : vector<4x1x1xi32> to vector<4x8x1xi32>
    %7 = arith.cmpi slt, %5, %6 : vector<4x8x1xi32>
    %cst = arith.constant 0.000000e+00 : f32
    %8 = vector.shape_cast %7 : vector<4x8x1xi1> to vector<4x8x1xi1>
    %9 = vector.broadcast %8 : vector<4x8x1xi1> to vector<4x8x32xi1>
    %10 = vector.broadcast %cst : f32 to vector<4x8x32xf32>
    %11 = arith.select %9, %3, %10 : vector<4x8x32xi1>, vector<4x8x32xf32>
    %12 = math.absf %11 : vector<4x8x32xf32>
    %cst_8 = arith.constant 1.000000e+00 : f32
    %13 = vector.broadcast %cst_8 : f32 to vector<4x8x32xf32>
    %14 = arith.cmpf olt, %12, %13 : vector<4x8x32xf32>
    %cst_9 = arith.constant 5.000000e-01 : f32
    %15 = vector.broadcast %cst_9 : f32 to vector<4x8x32xf32>
    %16 = arith.mulf %15, %11 : vector<4x8x32xf32>
    %17 = arith.mulf %16, %11 : vector<4x8x32xf32>
    %cst_10 = arith.constant 5.000000e-01 : f32
    %18 = vector.broadcast %cst_10 : f32 to vector<4x8x32xf32>
    %19 = arith.subf %12, %18 : vector<4x8x32xf32>
    %20 = arith.select %14, %17, %19 : vector<4x8x32xi1>, vector<4x8x32xf32>
    %cst_11 = arith.constant dense<0.000000e+00> : vector<4x32xf32>
    %21 = vector.multi_reduction <add>, %20, %cst_11 [1] : vector<4x8x32xf32> to vector<4x32xf32>
    %22 = vector.shape_cast %21 : vector<4x32xf32> to vector<4x1x32xf32>
    %cst_12 = arith.constant dense<0.000000e+00> : vector<1x32xf32>
    %23 = vector.multi_reduction <add>, %22, %cst_12 [0] : vector<4x1x32xf32> to vector<1x32xf32>
    %24 = vector.shape_cast %23 : vector<1x32xf32> to vector<1x1x32xf32>
    %c0_13 = arith.constant 0 : index
    %c0_14 = arith.constant 0 : index
    %c0_15 = arith.constant 0 : index
    %25 = vector.load %arg4[%c0_13, %c0_14, %c0_15] : memref<1x1x32xf32, #tpu.memory_space<vmem>>, vector<1x1x32xf32>
    tpu.vector_store %arg4[%c0_13, %c0_14, %c0_15], %24 {strides = array<i32>} : memref<1x1x32xf32, #tpu.memory_space<vmem>>, vector<1x1x32xf32>,
    %cst_16 = arith.constant dense<0.000000e+00> : vector<4x32xf32>
    %26 = vector.multi_reduction <add>, %11, %cst_16 [1] : vector<4x8x32xf32> to vector<4x32xf32>
    %27 = vector.shape_cast %26 : vector<4x32xf32> to vector<4x1x32xf32>
    %28 = arith.sitofp %2 : vector<4x1x1xi32> to vector<4x1x1xf32>
    %cst_17 = arith.constant 1.000000e+00 : f32
    %29 = vector.broadcast %cst_17 : f32 to vector<4x1x1xf32>
    %30 = arith.maximumf %28, %29 : vector<4x1x1xf32>
    %31 = vector.broadcast %30 : vector<4x1x1xf32> to vector<4x1x32xf32>
    %32 = arith.divf %27, %31 : vector<4x1x32xf32>
    %33 = math.absf %32 : vector<4x1x32xf32>
    %cst_18 = arith.constant 1.000000e+00 : f32
    %34 = vector.broadcast %cst_18 : f32 to vector<4x1x32xf32>
    %35 = arith.cmpf olt, %33, %34 : vector<4x1x32xf32>
    %cst_19 = arith.constant 5.000000e-01 : f32
    %36 = vector.broadcast %cst_19 : f32 to vector<4x1x32xf32>
    %37 = arith.mulf %36, %32 : vector<4x1x32xf32>
    %38 = arith.mulf %37, %32 : vector<4x1x32xf32>
    %cst_20 = arith.constant 5.000000e-01 : f32
    %39 = vector.broadcast %cst_20 : f32 to vector<4x1x32xf32>
    %40 = arith.subf %33, %39 : vector<4x1x32xf32>
    %41 = arith.select %35, %38, %40 : vector<4x1x32xi1>, vector<4x1x32xf32>
    %cst_21 = arith.constant dense<0.000000e+00> : vector<1x32xf32>
    %42 = vector.multi_reduction <add>, %41, %cst_21 [0] : vector<4x1x32xf32> to vector<1x32xf32>
    %43 = vector.shape_cast %42 : vector<1x32xf32> to vector<1x1x32xf32>
    %c0_22 = arith.constant 0 : index
    %c0_23 = arith.constant 0 : index
    %c0_24 = arith.constant 0 : index
    %44 = vector.load %arg5[%c0_22, %c0_23, %c0_24] : memref<1x1x32xf32, #tpu.memory_space<vmem>>, vector<1x1x32xf32>
    tpu.vector_store %arg5[%c0_22, %c0_23, %c0_24], %43 {strides = array<i32>} : memref<1x1x32xf32, #tpu.memory_space<vmem>>, vector<1x1x32xf32>,
    return
  }
  func.func @transform_0(%arg0: i32) -> (i32, i32, i32) {
    %c0_i32 = arith.constant 0 : i32
    %c0_i32_0 = arith.constant 0 : i32
    %c0_i32_1 = arith.constant 0 : i32
    return %arg0, %c0_i32, %c0_i32_0 : i32, i32, i32
  }
  func.func @transform_1(%arg0: i32) -> (i32, i32, i32) {
    %c0_i32 = arith.constant 0 : i32
    %c0_i32_0 = arith.constant 0 : i32
    %c0_i32_1 = arith.constant 0 : i32
    return %arg0, %c0_i32, %c0_i32_0 : i32, i32, i32
  }
  func.func @transform_2(%arg0: i32) -> (i32, i32, i32) {
    %c0_i32 = arith.constant 0 : i32
    %c0_i32_0 = arith.constant 0 : i32
    %c0_i32_1 = arith.constant 0 : i32
    return %arg0, %c0_i32, %c0_i32_0 : i32, i32, i32
  }
  func.func @transform_3(%arg0: i32) -> (i32, i32, i32) {
    %c0_i32 = arith.constant 0 : i32
    %c0_i32_0 = arith.constant 0 : i32
    %c0_i32_1 = arith.constant 0 : i32
    return %arg0, %c0_i32, %c0_i32_0 : i32, i32, i32
  }
  func.func @transform_4(%arg0: i32) -> (i32, i32, i32) {
    %c0_i32 = arith.constant 0 : i32
    %c0_i32_0 = arith.constant 0 : i32
    %c0_i32_1 = arith.constant 0 : i32
    return %arg0, %c0_i32, %c0_i32_0 : i32, i32, i32
  }
}

</mosaic_0001>

<llo_original>
// kernel: tpu_custom_call.1
$region0: #{tpu_custom_call.1}
  #allocation0 [shape = 'u32[]', space=smem, size = 0x4, offset = 0x4, fixed_abs, tag = 'smem constant byte address 0x4 - core index']
  #allocation1 [shape = 'u32[144,128]{1,0:T(1,128)}', space=vmem, size = 0x12000, scoped, tag = 'internal scratch']
  %s0 = inlined_call_operand.hbm [shape: f32[4,8,32], index: 0, kind: input, shape index: {}]
  %s1 = inlined_call_operand.hbm [shape: f32[4,8,32], index: 1, kind: input, shape index: {}]
  %s2 = inlined_call_operand.vmem [shape: s32[4,1,1], index: 2, kind: input, shape index: {}]
  %s3 = inlined_call_operand.hbm [shape: f32[1,1,32], index: 3, kind: output, shape index: {0}]
  %s4 = inlined_call_operand.hbm [shape: f32[1,1,32], index: 4, kind: output, shape index: {1}]
  %5 = xla_tuple %s3, %s4
  %s6 = sld [smem:[#allocation0]]
  $region38: #{tpu_custom_call.1} parent=0
    _
  %s8 = ssub.s32 1, %s6
  %s9 = scalar_select 0, %s8, %s6
  $region1: #{tpu_custom_call.1} parent=0
    #allocation2 [shape = 'u8[16384]{0}', space=vmem, size = 0x4000, scoped, tag = 'input window, operand 0, single buffered']
    #allocation3 [shape = 's32[1]{0}', space=sflag, size = 0x4, scoped, tag = 'scoped memory for tpu_custom_call.1']
    #allocation4 [shape = 's32[1]{0}', space=sflag, size = 0x4, scoped, tag = 'scoped memory for tpu_custom_call.1']
    #allocation5 [shape = 'u8[16384]{0}', space=vmem, size = 0x4000, scoped, tag = 'input window, operand 1, single buffered']
    #allocation6 [shape = 's32[1]{0}', space=sflag, size = 0x4, scoped, tag = 'scoped memory for tpu_custom_call.1']
    #allocation7 [shape = 'u8[512]{0}', space=vmem, size = 0x400, scoped, tag = 'output window, operand 0, single buffered']
    #allocation8 [shape = 'u8[512]{0}', space=vmem, size = 0x400, scoped, tag = 'output window, operand 1, single buffered']
    #allocation9 [shape = 's32[1]{0}', space=sflag, size = 0x4, scoped, tag = 'scoped memory for tpu_custom_call.1']
    %10 = vsyncpa [#allocation3], 0
    %11 = vsyncpa [#allocation6], 0
    %12 = vsyncpa [#allocation4], 0
    %13 = vsyncpa [#allocation9], 0
    // Predicated region
    $region2: #{tpu_custom_call.1} parent=1 // pred_check
      _
    $region3: #{tpu_custom_call.1} parent=1 // pred_check_branch
      %15 = sbr.rel (0) target = $region5
    $region4: #{tpu_custom_call.1} parent=1 // pred_region
      %s17 = ssub.s32 512, 512
      %18 = vsyncadd [#allocation3], %s17
      %s19 = sshll.u32 [#allocation2], 4
      %s20 = int_to_ptr.vmem [resolvable:$true] %s19
      %25 = dma.hbm_to_vmem [thread:$0]  %s0, 512, %s20, [#allocation3], 128, 128, 8
    $region5: #{tpu_custom_call.1} parent=1 // pred_fallthru
      _
    // Predicated region
    $region6: #{tpu_custom_call.1} parent=1 // pred_check
      _
    $region7: #{tpu_custom_call.1} parent=1 // pred_check_branch
      %27 = sbr.rel (0) target = $region9
    $region8: #{tpu_custom_call.1} parent=1 // pred_region
      %s29 = ssub.s32 512, 512
      %30 = vsyncadd [#allocation6], %s29
      %s31 = sshll.u32 [#allocation5], 4
      %s32 = int_to_ptr.vmem [resolvable:$true] %s31
      %37 = dma.hbm_to_vmem [thread:$0]  %s1, 512, %s32, [#allocation6], 128, 128, 8
    $region9: #{tpu_custom_call.1} parent=1 // pred_fallthru
      _
    // Predicated region
    $region10: #{tpu_custom_call.1} parent=1 // pred_check
      _
    $region11: #{tpu_custom_call.1} parent=1 // pred_check_branch
      %39 = sbr.rel (0) target = $region13
    $region12: #{tpu_custom_call.1} parent=1 // pred_region
      _
    $region13: #{tpu_custom_call.1} parent=1 // pred_fallthru
      _
    // Predicated region
    $region14: #{tpu_custom_call.1} parent=1 // pred_check
      _
    $region15: #{tpu_custom_call.1} parent=1 // pred_check_branch
      %41 = sbr.rel (0) target = $region17
    $region16: #{tpu_custom_call.1} parent=1 // pred_region
      %42 = dma.done [#allocation3], 512
    $region17: #{tpu_custom_call.1} parent=1 // pred_fallthru
      _
    // Predicated region
    $region18: #{tpu_custom_call.1} parent=1 // pred_check
      _
    $region19: #{tpu_custom_call.1} parent=1 // pred_check_branch
      %44 = sbr.rel (0) target = $region21
    $region20: #{tpu_custom_call.1} parent=1 // pred_region
      %45 = dma.done [#allocation6], 512
    $region21: #{tpu_custom_call.1} parent=1 // pred_fallthru
      _
    %v46 = vld [vmem:[#allocation2] sm:$0xff]
    %v47 = vld [vmem:[#allocation2 + $0x8] sm:$0xff]
    %v48 = vld [vmem:[#allocation2 + $0x10] sm:$0xff]
    %v49 = vld [vmem:[#allocation2 + $0x18] sm:$0xff]
    %v50 = vld [vmem:[#allocation5] sm:$0xff]
    %v51 = vld [vmem:[#allocation5 + $0x8] sm:$0xff]
    %v52 = vld [vmem:[#allocation5 + $0x10] sm:$0xff]
    %v53 = vld [vmem:[#allocation5 + $0x18] sm:$0xff]
    %v54 = vld [vmem:[%s2] sm:$0x1]
    %v55 = vld [vmem:[%s2 + $0x1] sm:$0x1]
    %v56 = vld [vmem:[%s2 + $0x2] sm:$0x1]
    %v57 = vld [vmem:[%s2 + $0x3] sm:$0x1]
    %v58 = vsub.f32 %v46, %v50
    %v59 = vsub.f32 %v47, %v51
    %v60 = vsub.f32 %v48, %v52
    %v61 = vsub.f32 %v49, %v53
    %v62 = vlaneseq
    %v63 = vshrl.u32 %v62, 7
    %v64 = vlaneseq
    %v65 = vshrl.u32 %v64, 7
    %v66 = vsub.s32 0, %v65
    %v67 = vrot.slane %v54, %v66
    %v68 = vlaneseq
    %v69 = vshrl.u32 %v68, 7
    %v70 = vsub.s32 0, %v69
    %v71 = vrot.slane %v55, %v70
    %v72 = vlaneseq
    %v73 = vshrl.u32 %v72, 7
    %v74 = vsub.s32 0, %v73
    %v75 = vrot.slane %v56, %v74
    %v76 = vlaneseq
    %v77 = vshrl.u32 %v76, 7
    %v78 = vsub.s32 0, %v77
    %v79 = vrot.slane %v57, %v78
    %vm80 = vcmp.lt.s32.totalorder %v63, %v67
    %vm81 = vcmp.lt.s32.totalorder %v63, %v71
    %vm82 = vcmp.lt.s32.totalorder %v63, %v75
    %vm83 = vcmp.lt.s32.totalorder %v63, %v79
    %v84 = vsel %vm80, 1, 0
    %v85 = vsel %vm81, 1, 0
    %v86 = vsel %vm82, 1, 0
    %v87 = vsel %vm83, 1, 0
    %88 = vset.pattern.permute.xlu0 0
    %89 = vperm.xlu0 %88, %v84
    %v90 = vpop.permute.xlu0 %89
    %91 = vset.pattern.permute.xlu0 0
    %92 = vperm.xlu0 %91, %v85
    %v93 = vpop.permute.xlu0 %92
    %94 = vset.pattern.permute.xlu0 0
    %95 = vperm.xlu0 %94, %v86
    %v96 = vpop.permute.xlu0 %95
    %97 = vset.pattern.permute.xlu0 0
    %98 = vperm.xlu0 %97, %v87
    %v99 = vpop.permute.xlu0 %98
    %vm100 = vcmp.eq.s32.totalorder %v90, 1
    %vm101 = vcmp.eq.s32.totalorder %v93, 1
    %vm102 = vcmp.eq.s32.totalorder %v96, 1
    %vm103 = vcmp.eq.s32.totalorder %v99, 1
    %v104 = vsel %vm100, %v58, 0.0
    %v105 = vsel %vm101, %v59, 0.0
    %v106 = vsel %vm102, %v60, 0.0
    %v107 = vsel %vm103, %v61, 0.0
    %v108 = vand.u32 2147483647, %v104
    %v109 = vand.u32 2147483647, %v105
    %v110 = vand.u32 2147483647, %v106
    %v111 = vand.u32 2147483647, %v107
    %vm112 = vcmp.lt.f32.partialorder %v108, 1.0
    %vm113 = vcmp.lt.f32.partialorder %v109, 1.0
    %vm114 = vcmp.lt.f32.partialorder %v110, 1.0
    %vm115 = vcmp.lt.f32.partialorder %v111, 1.0
    %v116 = vmul.f32 %v104, 0.5
    %v117 = vmul.f32 %v105, 0.5
    %v118 = vmul.f32 %v106, 0.5
    %v119 = vmul.f32 %v107, 0.5
    %v120 = vmul.f32 %v116, %v104
    %v121 = vmul.f32 %v117, %v105
    %v122 = vmul.f32 %v118, %v106
    %v123 = vmul.f32 %v119, %v107
    %v124 = vsub.f32 %v108, 0.5
    %v125 = vsub.f32 %v109, 0.5
    %v126 = vsub.f32 %v110, 0.5
    %v127 = vsub.f32 %v111, 0.5
    %v128 = vsel %vm112, %v120, %v124
    %v129 = vsel %vm113, %v121, %v125
    %v130 = vsel %vm114, %v122, %v126
    %v131 = vsel %vm115, %v123, %v127
    %vm132 = vcmask 261120
    %v133 = vsel %vm132, %v128, 0.0
    %v134 = vrot.slane %v133, 4
    %v135 = vadd.f32 %v133, %v134
    %v136 = vrot.slane %v135, 2
    %v137 = vadd.f32 %v135, %v136
    %v138 = vrot.slane %v137, 1
    %v139 = vadd.f32 %v137, %v138
    %v140 = vsel %vm132, %v129, 0.0
    %v141 = vrot.slane %v140, 4
    %v142 = vadd.f32 %v140, %v141
    %v143 = vrot.slane %v142, 2
    %v144 = vadd.f32 %v142, %v143
    %v145 = vrot.slane %v144, 1
    %v146 = vadd.f32 %v144, %v145
    %v147 = vsel %vm132, %v130, 0.0
    %v148 = vrot.slane %v147, 4
    %v149 = vadd.f32 %v147, %v148
    %v150 = vrot.slane %v149, 2
    %v151 = vadd.f32 %v149, %v150
    %v152 = vrot.slane %v151, 1
    %v153 = vadd.f32 %v151, %v152
    %v154 = vsel %vm132, %v131, 0.0
    %v155 = vrot.slane %v154, 4
    %v156 = vadd.f32 %v154, %v155
    %v157 = vrot.slane %v156, 2
    %v158 = vadd.f32 %v156, %v157
    %v159 = vrot.slane %v158, 1
    %v160 = vadd.f32 %v158, %v159
    %v161 = vsel %vm132, %v139, 0.0
    %v162 = vsel %vm132, %v146, 0.0
    %v163 = vadd.f32 %v161, %v162
    %v164 = vsel %vm132, %v153, 0.0
    %v165 = vadd.f32 %v163, %v164
    %v166 = vsel %vm132, %v160, 0.0
    %v167 = vadd.f32 %v165, %v166
    %vm168 = vcmask 253952
    %169 = vst.msk [vmem:[#allocation7] sm:$0x1] %vm168, %v167
    %v170 = vsel %vm132, %v104, 0.0
    %v171 = vrot.slane %v170, 4
    %v172 = vadd.f32 %v170, %v171
    %v173 = vrot.slane %v172, 2
    %v174 = vadd.f32 %v172, %v173
    %v175 = vrot.slane %v174, 1
    %v176 = vadd.f32 %v174, %v175
    %v177 = vsel %vm132, %v105, 0.0
    %v178 = vrot.slane %v177, 4
    %v179 = vadd.f32 %v177, %v178
    %v180 = vrot.slane %v179, 2
    %v181 = vadd.f32 %v179, %v180
    %v182 = vrot.slane %v181, 1
    %v183 = vadd.f32 %v181, %v182
    %v184 = vsel %vm132, %v106, 0.0
    %v185 = vrot.slane %v184, 4
    %v186 = vadd.f32 %v184, %v185
    %v187 = vrot.slane %v186, 2
    %v188 = vadd.f32 %v186, %v187
    %v189 = vrot.slane %v188, 1
    %v190 = vadd.f32 %v188, %v189
    %v191 = vsel %vm132, %v107, 0.0
    %v192 = vrot.slane %v191, 4
    %v193 = vadd.f32 %v191, %v192
    %v194 = vrot.slane %v193, 2
    %v195 = vadd.f32 %v193, %v194
    %v196 = vrot.slane %v195, 1
    %v197 = vadd.f32 %v195, %v196
    %v198 = vcvt.s32.f32 %v54
    %v199 = vcvt.s32.f32 %v55
    %v200 = vcvt.s32.f32 %v56
    %v201 = vcvt.s32.f32 %v57
    %v202 = vmax.f32 %v198, 1.0
    %v203 = vmax.f32 %v199, 1.0
    %v204 = vmax.f32 %v200, 1.0
    %v205 = vmax.f32 %v201, 1.0
    %207 = vset.pattern.permute.xlu0 0
    %208 = vperm.xlu0 %207, %v202
    %v209 = vpop.permute.xlu0 %208
    %v211 = vlaneseq
    %v212 = vshrl.u32 %v211, 7
    %v213 = vsub.s32 0, %v212
    %v214 = vrot.slane %v209, %v213
    %216 = vset.pattern.permute.xlu0 0
    %217 = vperm.xlu0 %216, %v203
    %v218 = vpop.permute.xlu0 %217
    %v220 = vlaneseq
    %v221 = vshrl.u32 %v220, 7
    %v222 = vsub.s32 0, %v221
    %v223 = vrot.slane %v218, %v222
    %225 = vset.pattern.permute.xlu0 0
    %226 = vperm.xlu0 %225, %v204
    %v227 = vpop.permute.xlu0 %226
    %v229 = vlaneseq
    %v230 = vshrl.u32 %v229, 7
    %v231 = vsub.s32 0, %v230
    %v232 = vrot.slane %v227, %v231
    %234 = vset.pattern.permute.xlu0 0
    %235 = vperm.xlu0 %234, %v205
    %v236 = vpop.permute.xlu0 %235
    %v238 = vlaneseq
    %v239 = vshrl.u32 %v238, 7
    %v240 = vsub.s32 0, %v239
    %v241 = vrot.slane %v236, %v240
    %v242 = vrcp.pop %v214
    %v243 = vmul.f32 %v176, %v242
    %v244 = vrcp.pop %v223
    %v245 = vmul.f32 %v183, %v244
    %v246 = vrcp.pop %v232
    %v247 = vmul.f32 %v190, %v246
    %v248 = vrcp.pop %v241
    %v249 = vmul.f32 %v197, %v248
    %v250 = vand.u32 2147483647, %v243
    %v251 = vand.u32 2147483647, %v245
    %v252 = vand.u32 2147483647, %v247
    %v253 = vand.u32 2147483647, %v249
    %vm254 = vcmp.lt.f32.partialorder %v250, 1.0
    %vm255 = vcmp.lt.f32.partialorder %v251, 1.0
    %vm256 = vcmp.lt.f32.partialorder %v252, 1.0
    %vm257 = vcmp.lt.f32.partialorder %v253, 1.0
    %v258 = vmul.f32 %v243, 0.5
    %v259 = vmul.f32 %v245, 0.5
    %v260 = vmul.f32 %v247, 0.5
    %v261 = vmul.f32 %v249, 0.5
    %v262 = vmul.f32 %v258, %v243
    %v263 = vmul.f32 %v259, %v245
    %v264 = vmul.f32 %v260, %v247
    %v265 = vmul.f32 %v261, %v249
    %v266 = vsub.f32 %v250, 0.5
    %v267 = vsub.f32 %v251, 0.5
    %v268 = vsub.f32 %v252, 0.5
    %v269 = vsub.f32 %v253, 0.5
    %v270 = vsel %vm254, %v262, %v266
    %v271 = vsel %vm255, %v263, %v267
    %v272 = vsel %vm256, %v264, %v268
    %v273 = vsel %vm257, %v265, %v269
    %v274 = vsel %vm132, %v270, 0.0
    %v275 = vsel %vm132, %v271, 0.0
    %v276 = vadd.f32 %v274, %v275
    %v277 = vsel %vm132, %v272, 0.0
    %v278 = vadd.f32 %v276, %v277
    %v279 = vsel %vm132, %v273, 0.0
    %v280 = vadd.f32 %v278, %v279
    %281 = vst.msk [vmem:[#allocation8] sm:$0x1] %vm168, %v280
    // Predicated region
    $region22: #{tpu_custom_call.1} parent=1 // pred_check
      _
    $region23: #{tpu_custom_call.1} parent=1 // pred_check_branch
      %283 = sbr.rel (0) target = $region25
    $region24: #{tpu_custom_call.1} parent=1 // pred_region
      %s285 = ssub.s32 16, 16
      %286 = vsyncadd [#allocation4], %s285
      %s288 = sshll.u32 [#allocation7], 4
      %s289 = int_to_ptr.vmem [resolvable:$true] %s288
      %291 = dma.vmem_to_hbm [thread:$0]  %s289, 16, %s3, [#allocation4]
    $region25: #{tpu_custom_call.1} parent=1 // pred_fallthru
      _
    // Predicated region
    $region26: #{tpu_custom_call.1} parent=1 // pred_check
      _
    $region27: #{tpu_custom_call.1} parent=1 // pred_check_branch
      %293 = sbr.rel (0) target = $region29
    $region28: #{tpu_custom_call.1} parent=1 // pred_region
      %s295 = ssub.s32 16, 16
      %296 = vsyncadd [#allocation9], %s295
      %s298 = sshll.u32 [#allocation8], 4
      %s299 = int_to_ptr.vmem [resolvable:$true] %s298
      %301 = dma.vmem_to_hbm [thread:$0]  %s299, 16, %s4, [#allocation9]
    $region29: #{tpu_custom_call.1} parent=1 // pred_fallthru
      _
    // Predicated region
    $region30: #{tpu_custom_call.1} parent=1 // pred_check
      _
    $region31: #{tpu_custom_call.1} parent=1 // pred_check_branch
      %303 = sbr.rel (0) target = $region33
    $region32: #{tpu_custom_call.1} parent=1 // pred_region
      %304 = dma.done [#allocation4], 16
    $region33: #{tpu_custom_call.1} parent=1 // pred_fallthru
      _
    // Predicated region
    $region34: #{tpu_custom_call.1} parent=1 // pred_check
      _
    $region35: #{tpu_custom_call.1} parent=1 // pred_check_branch
      %306 = sbr.rel (0) target = $region37
    $region36: #{tpu_custom_call.1} parent=1 // pred_region
      %307 = dma.done [#allocation9], 16
    $region37: #{tpu_custom_call.1} parent=1 // pred_fallthru
      _
    %308 = vsyncpa [#allocation3], 1
    %309 = vsyncpa [#allocation6], 1
    %310 = vsyncpa [#allocation4], 1
    %311 = vsyncpa [#allocation9], 1

</llo_original>
